<compile_context>
chip_gen: v5e
topology: v5e:2x2
jax: 0.10.0
libtpu: 0.0.40
codegen_flags: <defaults>
</compile_context>

<pallas_src>
import functools
import math

import jax
import jax.numpy as jnp
from jax.experimental import pallas as pl
from jax.experimental.pallas import tpu as pltpu

GRID_SIZE = 5
SPLINE_ORDER = 3
GRID_RANGE = (-1.0, 1.0)


def _round_up(x, m):
    return ((x + m - 1) // m) * m


# ----------------------------------------------------------------------------
# Pallas kernel: packed B-spline basis evaluation + one fused MXU contraction
# ----------------------------------------------------------------------------
def kan_linear_kernel(x_ref, consts_ref, w_ref, out_ref, *,
                      in_features, spline_order, grid_size, matmul_dtype):
    x = x_ref[...]                                    # (TB, in)  float32
    L = grid_size + 2 * spline_order + 1              # knots per feature
    n0 = L - 1                                        # degree-0 bases

    # x replicated along lanes once, to the degree-0 packed width (TB, n0*in).
    x_t = jnp.concatenate([x] * n0, axis=-1)

    # Degree-0 indicator bases, all intervals at once (half-open [g_j, g_{j+1})
    # exactly like the PyTorch implementation: x == last knot gives 0 basis).
    k_left = consts_ref[0:1, :]                       # (1, n0*in)
    k_right = consts_ref[1:2, :]
    bases = jnp.where((x_t >= k_left) & (x_t < k_right), 1.0, 0.0)
    bases = bases.astype(jnp.float32)

    # Cox–de Boor recursion in packed layout; denominators' reciprocals are
    # folded into the precomputed constant rows (no divides in the kernel):
    #   new_j = (x*r1_j - g_j*r1_j) * old_j + (g_{j+k+1}*r2_j - x*r2_j) * old_{j+1}
    for k in range(1, spline_order + 1):
        wk = (L - 1 - k) * in_features                # packed width at degree k
        r = 2 + 4 * (k - 1)
        a1 = consts_ref[r + 0:r + 1, :wk]             # r1
        b1 = consts_ref[r + 1:r + 2, :wk]             # g_j * r1
        a2 = consts_ref[r + 2:r + 3, :wk]             # r2
        b2 = consts_ref[r + 3:r + 4, :wk]             # g_{j+k+1} * r2
        xt = x_t[:, :wk]
        lo = bases[:, :wk]                            # old_j   blocks
        hi = bases[:, in_features:]                   # old_{j+1} blocks (width wk)
        bases = (xt * a1 - b1) * lo + (b2 - xt * a2) * hi
    # bases: (TB, C*in) with C = grid_size + spline_order

    # Base branch activation (f32 on VPU/EUP), then one fused MXU contraction:
    # [SiLU(x) | bases] @ [base_weight^T ; reshaped scaled_spline_weight]
    act = x * jax.nn.sigmoid(x)
    lhs = jnp.concatenate([act, bases], axis=-1).astype(matmul_dtype)
    out_ref[...] = jnp.dot(lhs, w_ref[...],
                           preferred_element_type=jnp.float32
                           ).astype(out_ref.dtype)


# ----------------------------------------------------------------------------
# Wrapper: constant packing, weight fusion/padding, batch tiling, pallas_call
# ----------------------------------------------------------------------------
def kan_linear_forward(x, grid, base_weight, spline_weight, spline_scaler,
                       *, grid_size=GRID_SIZE, spline_order=SPLINE_ORDER,
                       tile_b=256, matmul_dtype=jnp.bfloat16,
                       vmem_limit_bytes=48 * 1024 * 1024):
    out_features, in_features = base_weight.shape
    orig_shape = x.shape
    xf = x.reshape(-1, in_features).astype(jnp.float32)
    B = xf.shape[0]

    # Batch tiling: clamp the tile to the (sublane-rounded) batch and zero-pad
    # the batch to a multiple of the tile.  Pad rows produce finite garbage
    # (no divides in the kernel) and are sliced off below.
    tile_b_eff = min(tile_b, _round_up(max(B, 8), 8))
    B_pad = _round_up(B, tile_b_eff)
    if B_pad != B:
        xf = jnp.pad(xf, ((0, B_pad - B), (0, 0)))

    L = grid_size + 2 * spline_order + 1
    C = grid_size + spline_order
    grid_T = jnp.asarray(grid, jnp.float32).T          # (L, in)
    n0 = L - 1
    W0 = n0 * in_features

    # Packed per-degree constants (knots + reciprocal denominators), padded to
    # the degree-0 width.  Knots are strictly increasing so reciprocals are
    # finite; precomputing them here also removes all in-kernel divides.
    rows = [jnp.concatenate([grid_T[j] for j in range(n0)]),
            jnp.concatenate([grid_T[j + 1] for j in range(n0)])]
    for k in range(1, spline_order + 1):
        nk = L - 1 - k
        gl = jnp.concatenate([grid_T[j] for j in range(nk)])
        gkl = jnp.concatenate([grid_T[j + k] for j in range(nk)])
        g1 = jnp.concatenate([grid_T[j + 1] for j in range(nk)])
        gr = jnp.concatenate([grid_T[j + k + 1] for j in range(nk)])
        r1 = 1.0 / (gkl - gl)
        r2 = 1.0 / (gr - g1)
        pad = W0 - nk * in_features
        rows += [jnp.pad(v, (0, pad)) for v in (r1, gl * r1, r2, gr * r2)]
    consts = jnp.stack(rows, axis=0)                   # (2 + 4*order, W0) f32

    # Fused weight: stack base_weight^T on top of the reshaped scaled spline
    # weight along the contraction axis, then lane-pad the output dim to 128.
    base_wT = jnp.asarray(base_weight, jnp.float32).T                   # (in, out)
    scaled = (jnp.asarray(spline_weight, jnp.float32)
              * jnp.asarray(spline_scaler, jnp.float32)[:, :, None])    # (out, in, C)
    spline_mat = jnp.transpose(scaled, (2, 1, 0)).reshape(
        C * in_features, out_features)                                  # (C*in, out)
    w_big = jnp.concatenate([base_wT, spline_mat], axis=0)              # (K, out)
    K = (C + 1) * in_features
    out_pad = _round_up(out_features, 128)
    if out_pad != out_features:
        w_big = jnp.pad(w_big, ((0, 0), (0, out_pad - out_features)))
    w_big = w_big.astype(matmul_dtype)

    kernel = functools.partial(kan_linear_kernel,
                               in_features=in_features,
                               spline_order=spline_order,
                               grid_size=grid_size,
                               matmul_dtype=matmul_dtype)

    cost = pl.CostEstimate(
        flops=2 * B_pad * K * out_pad + 10 * B_pad * W0,
        transcendentals=B_pad * in_features,
        bytes_accessed=(int(xf.size) * 4 + int(consts.size) * 4
                        + int(w_big.size) * int(w_big.dtype.itemsize)
                        + B_pad * out_pad * 4))

    out = pl.pallas_call(
        kernel,
        out_shape=jax.ShapeDtypeStruct((B_pad, out_pad), jnp.float32),
        grid_spec=pltpu.PrefetchScalarGridSpec(
            num_scalar_prefetch=0,
            grid=(B_pad // tile_b_eff,),
            in_specs=[
                pl.BlockSpec((tile_b_eff, in_features), lambda i: (i, 0)),
                pl.BlockSpec(consts.shape, lambda i: (0, 0)),   # resident
                pl.BlockSpec(w_big.shape, lambda i: (0, 0)),    # resident
            ],
            out_specs=pl.BlockSpec((tile_b_eff, out_pad), lambda i: (i, 0)),
        ),
        compiler_params=pltpu.CompilerParams(
            dimension_semantics=("parallel",),
            vmem_limit_bytes=vmem_limit_bytes),
        cost_estimate=cost,
    )(xf, consts, w_big)

    out = out[:B, :out_features]
    return out.reshape(*orig_shape[:-1], out_features)


# ----------------------------------------------------------------------------
# Pure-JAX reference (same math, used only for a correctness check)
# ----------------------------------------------------------------------------
def kan_linear_reference(x, grid, base_weight, spline_weight, spline_scaler,
                         *, grid_size=GRID_SIZE, spline_order=SPLINE_ORDER):
    out_features, in_features = base_weight.shape
    orig_shape = x.shape
    xf = x.reshape(-1, in_features)

    xe = xf[:, :, None]                                   # (B, in, 1)
    bases = ((xe >= grid[None, :, :-1]) & (xe < grid[None, :, 1:])).astype(xf.dtype)
    for k in range(1, spline_order + 1):
        bases = ((xe - grid[None, :, :-(k + 1)])
                 / (grid[None, :, k:-1] - grid[None, :, :-(k + 1)]) * bases[:, :, :-1]
                 + (grid[None, :, k + 1:] - xe)
                 / (grid[None, :, k + 1:] - grid[None, :, 1:-k]) * bases[:, :, 1:])

    hi = jax.lax.Precision.HIGHEST
    base_out = jnp.matmul(xf * jax.nn.sigmoid(xf), base_weight.T, precision=hi)
    scaled = spline_weight * spline_scaler[:, :, None]
    spline_out = jnp.matmul(bases.reshape(xf.shape[0], -1),
                            scaled.reshape(out_features, -1).T, precision=hi)
    out = base_out + spline_out
    return out.reshape(*orig_shape[:-1], out_features)


# ----------------------------------------------------------------------------
# Deterministic parameter construction (synthetic; not a checkpoint load)
# ----------------------------------------------------------------------------
def make_params(key, in_features, out_features,
                grid_size=GRID_SIZE, spline_order=SPLINE_ORDER,
                grid_range=GRID_RANGE, scale_base=1.0, scale_spline=1.0):
    h = (grid_range[1] - grid_range[0]) / grid_size
    knots = (jnp.arange(-spline_order, grid_size + spline_order + 1,
                        dtype=jnp.float32) * h + grid_range[0])
    grid = jnp.broadcast_to(knots, (in_features, knots.shape[0]))

    k_base, k_spline, k_scaler = jax.random.split(key, 3)
    bound_base = math.sqrt(6.0 / (1.0 + 5.0 * scale_base ** 2)) / math.sqrt(in_features)
    base_weight = jax.random.uniform(k_base, (out_features, in_features),
                                     jnp.float32, -bound_base, bound_base)
    # TODO(synk): torch init runs a lstsq (curve2coeff) on noise; we use small
    # deterministic random coefficients instead (forward semantics unchanged).
    spline_weight = 0.1 * jax.random.normal(
        k_spline, (out_features, in_features, grid_size + spline_order), jnp.float32)
    bound_sc = math.sqrt(6.0 / (1.0 + 5.0 * scale_spline ** 2)) / math.sqrt(in_features)
    spline_scaler = jax.random.uniform(k_scaler, (out_features, in_features),
                                       jnp.float32, -bound_sc, bound_sc)
    return grid, base_weight, spline_weight, spline_scaler


if __name__ == "__main__":
    in_features, out_features = 32, 32
    batch, seq = 2, 8                      # flattened batch = 16

    key = jax.random.PRNGKey(0)
    k_x, k_p = jax.random.split(key)
    x = jax.random.uniform(k_x, (batch, seq, in_features), jnp.float32,
                           minval=-1.0, maxval=1.0)
    grid, base_w, spline_w, spline_s = make_params(k_p, in_features, out_features)

    out = kan_linear_forward(x, grid, base_w, spline_w, spline_s)
    out = jax.block_until_ready(out)

    ref = kan_linear_reference(x, grid, base_w, spline_w, spline_s)
    assert out.shape == (batch, seq, out_features)
    # bf16 matmul operands (with f32 MXU accumulation) -> loosened tolerance.
    assert jnp.allclose(out, ref, atol=3e-2, rtol=3e-2), "mismatch vs reference"

    print("KERNEL_OK")
</pallas_src>

<mosaic_0001>
module attributes {stable_mosaic.version = 11 : i64} {
  func.func @kan_linear_kernel(%arg0: i32, %arg1: memref<16x32xf32, #tpu.memory_space<vmem>>, %arg2: memref<14x352xf32, #tpu.memory_space<vmem>>, %arg3: memref<288x128xbf16, #tpu.memory_space<vmem>>, %arg4: memref<16x128xf32, #tpu.memory_space<vmem>>) attributes {dimension_semantics = [#tpu.dimension_semantics<parallel>], iteration_bounds = array<i64: 1>, scalar_prefetch = 0 : i64, scratch_operands = 0 : i64, tpu.core_type = #tpu.core_type<tc>, window_params = [{transform_indices = @transform_0, window_bounds = array<i64: 16, 32>}, {pipeline_mode = #tpu.pipeline_mode<synchronous>, transform_indices = @transform_1, window_bounds = array<i64: 14, 352>}, {pipeline_mode = #tpu.pipeline_mode<synchronous>, transform_indices = @transform_2, window_bounds = array<i64: 288, 128>}, {transform_indices = @transform_3, window_bounds = array<i64: 16, 128>}]} {
    %c0 = arith.constant 0 : index
    %c0_0 = arith.constant 0 : index
    %0 = vector.load %arg1[%c0, %c0_0] : memref<16x32xf32, #tpu.memory_space<vmem>>, vector<16x32xf32>
    %1 = tpu.concatenate %0, %0, %0, %0, %0, %0, %0, %0, %0, %0, %0 in 1 : vector<16x32xf32>, vector<16x32xf32>, vector<16x32xf32>, vector<16x32xf32>, vector<16x32xf32>, vector<16x32xf32>, vector<16x32xf32>, vector<16x32xf32>, vector<16x32xf32>, vector<16x32xf32>, vector<16x32xf32> -> vector<16x352xf32>
    %c0_1 = arith.constant 0 : index
    %c0_2 = arith.constant 0 : index
    %2 = vector.load %arg2[%c0_1, %c0_2] : memref<14x352xf32, #tpu.memory_space<vmem>>, vector<1x352xf32>
    %c1 = arith.constant 1 : index
    %c0_3 = arith.constant 0 : index
    %3 = vector.load %arg2[%c1, %c0_3] : memref<14x352xf32, #tpu.memory_space<vmem>>, vector<1x352xf32>
    %4 = vector.broadcast %2 : vector<1x352xf32> to vector<16x352xf32>
    %5 = arith.cmpf oge, %1, %4 : vector<16x352xf32>
    %6 = vector.broadcast %3 : vector<1x352xf32> to vector<16x352xf32>
    %7 = arith.cmpf olt, %1, %6 : vector<16x352xf32>
    %8 = arith.andi %5, %7 : vector<16x352xi1>
    %cst = arith.constant 1.000000e+00 : f32
    %cst_4 = arith.constant 0.000000e+00 : f32
    %9 = vector.broadcast %cst : f32 to vector<16x352xf32>
    %10 = vector.broadcast %cst_4 : f32 to vector<16x352xf32>
    %11 = arith.select %8, %9, %10 : vector<16x352xi1>, vector<16x352xf32>
    %c2 = arith.constant 2 : index
    %c0_5 = arith.constant 0 : index
    %12 = vector.load %arg2[%c2, %c0_5] : memref<14x352xf32, #tpu.memory_space<vmem>>, vector<1x320xf32>
    %c3 = arith.constant 3 : index
    %c0_6 = arith.constant 0 : index
    %13 = vector.load %arg2[%c3, %c0_6] : memref<14x352xf32, #tpu.memory_space<vmem>>, vector<1x320xf32>
    %c4 = arith.constant 4 : index
    %c0_7 = arith.constant 0 : index
    %14 = vector.load %arg2[%c4, %c0_7] : memref<14x352xf32, #tpu.memory_space<vmem>>, vector<1x320xf32>
    %c5 = arith.constant 5 : index
    %c0_8 = arith.constant 0 : index
    %15 = vector.load %arg2[%c5, %c0_8] : memref<14x352xf32, #tpu.memory_space<vmem>>, vector<1x320xf32>
    %16 = vector.extract_strided_slice %1 {offsets = [0, 0], sizes = [16, 320], strides = [1, 1]} : vector<16x352xf32> to vector<16x320xf32>
    %17 = vector.extract_strided_slice %11 {offsets = [0, 0], sizes = [16, 320], strides = [1, 1]} : vector<16x352xf32> to vector<16x320xf32>
    %18 = vector.extract_strided_slice %11 {offsets = [0, 32], sizes = [16, 320], strides = [1, 1]} : vector<16x352xf32> to vector<16x320xf32>
    %19 = vector.broadcast %12 : vector<1x320xf32> to vector<16x320xf32>
    %20 = arith.mulf %16, %19 : vector<16x320xf32>
    %21 = vector.broadcast %13 : vector<1x320xf32> to vector<16x320xf32>
    %22 = arith.subf %20, %21 : vector<16x320xf32>
    %23 = arith.mulf %22, %17 : vector<16x320xf32>
    %24 = vector.broadcast %14 : vector<1x320xf32> to vector<16x320xf32>
    %25 = arith.mulf %16, %24 : vector<16x320xf32>
    %26 = vector.broadcast %15 : vector<1x320xf32> to vector<16x320xf32>
    %27 = arith.subf %26, %25 : vector<16x320xf32>
    %28 = arith.mulf %27, %18 : vector<16x320xf32>
    %29 = arith.addf %23, %28 : vector<16x320xf32>
    %c6 = arith.constant 6 : index
    %c0_9 = arith.constant 0 : index
    %30 = vector.load %arg2[%c6, %c0_9] : memref<14x352xf32, #tpu.memory_space<vmem>>, vector<1x288xf32>
    %c7 = arith.constant 7 : index
    %c0_10 = arith.constant 0 : index
    %31 = vector.load %arg2[%c7, %c0_10] : memref<14x352xf32, #tpu.memory_space<vmem>>, vector<1x288xf32>
    %c8 = arith.constant 8 : index
    %c0_11 = arith.constant 0 : index
    %32 = vector.load %arg2[%c8, %c0_11] : memref<14x352xf32, #tpu.memory_space<vmem>>, vector<1x288xf32>
    %c9 = arith.constant 9 : index
    %c0_12 = arith.constant 0 : index
    %33 = vector.load %arg2[%c9, %c0_12] : memref<14x352xf32, #tpu.memory_space<vmem>>, vector<1x288xf32>
    %34 = vector.extract_strided_slice %1 {offsets = [0, 0], sizes = [16, 288], strides = [1, 1]} : vector<16x352xf32> to vector<16x288xf32>
    %35 = vector.extract_strided_slice %29 {offsets = [0, 0], sizes = [16, 288], strides = [1, 1]} : vector<16x320xf32> to vector<16x288xf32>
    %36 = vector.extract_strided_slice %29 {offsets = [0, 32], sizes = [16, 288], strides = [1, 1]} : vector<16x320xf32> to vector<16x288xf32>
    %37 = vector.broadcast %30 : vector<1x288xf32> to vector<16x288xf32>
    %38 = arith.mulf %34, %37 : vector<16x288xf32>
    %39 = vector.broadcast %31 : vector<1x288xf32> to vector<16x288xf32>
    %40 = arith.subf %38, %39 : vector<16x288xf32>
    %41 = arith.mulf %40, %35 : vector<16x288xf32>
    %42 = vector.broadcast %32 : vector<1x288xf32> to vector<16x288xf32>
    %43 = arith.mulf %34, %42 : vector<16x288xf32>
    %44 = vector.broadcast %33 : vector<1x288xf32> to vector<16x288xf32>
    %45 = arith.subf %44, %43 : vector<16x288xf32>
    %46 = arith.mulf %45, %36 : vector<16x288xf32>
    %47 = arith.addf %41, %46 : vector<16x288xf32>
    %c10 = arith.constant 10 : index
    %c0_13 = arith.constant 0 : index
    %48 = vector.load %arg2[%c10, %c0_13] : memref<14x352xf32, #tpu.memory_space<vmem>>, vector<1x256xf32>
    %c11 = arith.constant 11 : index
    %c0_14 = arith.constant 0 : index
    %49 = vector.load %arg2[%c11, %c0_14] : memref<14x352xf32, #tpu.memory_space<vmem>>, vector<1x256xf32>
    %c12 = arith.constant 12 : index
    %c0_15 = arith.constant 0 : index
    %50 = vector.load %arg2[%c12, %c0_15] : memref<14x352xf32, #tpu.memory_space<vmem>>, vector<1x256xf32>
    %c13 = arith.constant 13 : index
    %c0_16 = arith.constant 0 : index
    %51 = vector.load %arg2[%c13, %c0_16] : memref<14x352xf32, #tpu.memory_space<vmem>>, vector<1x256xf32>
    %52 = vector.extract_strided_slice %1 {offsets = [0, 0], sizes = [16, 256], strides = [1, 1]} : vector<16x352xf32> to vector<16x256xf32>
    %53 = vector.extract_strided_slice %47 {offsets = [0, 0], sizes = [16, 256], strides = [1, 1]} : vector<16x288xf32> to vector<16x256xf32>
    %54 = vector.extract_strided_slice %47 {offsets = [0, 32], sizes = [16, 256], strides = [1, 1]} : vector<16x288xf32> to vector<16x256xf32>
    %55 = vector.broadcast %48 : vector<1x256xf32> to vector<16x256xf32>
    %56 = arith.mulf %52, %55 : vector<16x256xf32>
    %57 = vector.broadcast %49 : vector<1x256xf32> to vector<16x256xf32>
    %58 = arith.subf %56, %57 : vector<16x256xf32>
    %59 = arith.mulf %58, %53 : vector<16x256xf32>
    %60 = vector.broadcast %50 : vector<1x256xf32> to vector<16x256xf32>
    %61 = arith.mulf %52, %60 : vector<16x256xf32>
    %62 = vector.broadcast %51 : vector<1x256xf32> to vector<16x256xf32>
    %63 = arith.subf %62, %61 : vector<16x256xf32>
    %64 = arith.mulf %63, %54 : vector<16x256xf32>
    %65 = arith.addf %59, %64 : vector<16x256xf32>
    %66 = arith.negf %0 : vector<16x32xf32>
    %67 = math.exp %66 : vector<16x32xf32>
    %cst_17 = arith.constant 1.000000e+00 : f32
    %68 = vector.broadcast %cst_17 : f32 to vector<16x32xf32>
    %69 = arith.addf %68, %67 : vector<16x32xf32>
    %70 = arith.divf %68, %69 : vector<16x32xf32>
    %71 = arith.mulf %0, %70 : vector<16x32xf32>
    %72 = tpu.concatenate %71, %65 in 1 : vector<16x32xf32>, vector<16x256xf32> -> vector<16x288xf32>
    %73 = arith.truncf %72 : vector<16x288xf32> to vector<16x288xbf16>
    %c0_18 = arith.constant 0 : index
    %c0_19 = arith.constant 0 : index
    %74 = vector.load %arg3[%c0_18, %c0_19] : memref<288x128xbf16, #tpu.memory_space<vmem>>, vector<288x128xbf16>
    %cst_20 = arith.constant dense<0.000000e+00> : vector<16x128xf32>
    %75 = tpu.matmul %73, %74, %cst_20 {dimension_numbers = #tpu.dot_dimension_numbers<[1], [0], [0], [1], [0, 0, 1, 1], [], []>} : vector<16x288xbf16>, vector<288x128xbf16>, vector<16x128xf32> -> vector<16x128xf32>
    %c0_21 = arith.constant 0 : index
    %c0_22 = arith.constant 0 : index
    %76 = vector.load %arg4[%c0_21, %c0_22] : memref<16x128xf32, #tpu.memory_space<vmem>>, vector<16x128xf32>
    tpu.vector_store %arg4[%c0_21, %c0_22], %75 {strides = array<i32>} : memref<16x128xf32, #tpu.memory_space<vmem>>, vector<16x128xf32>,
    return
  }
  func.func @transform_0(%arg0: i32) -> (i32, i32) {
    %c0_i32 = arith.constant 0 : i32
    %c0_i32_0 = arith.constant 0 : i32
    return %arg0, %c0_i32 : i32, i32
  }
  func.func @transform_1(%arg0: i32) -> (i32, i32) {
    %c0_i32 = arith.constant 0 : i32
    %c0_i32_0 = arith.constant 0 : i32
    %c0_i32_1 = arith.constant 0 : i32
    return %c0_i32, %c0_i32_0 : i32, i32
  }
  func.func @transform_2(%arg0: i32) -> (i32, i32) {
    %c0_i32 = arith.constant 0 : i32
    %c0_i32_0 = arith.constant 0 : i32
    %c0_i32_1 = arith.constant 0 : i32
    return %c0_i32, %c0_i32_0 : i32, i32
  }
  func.func @transform_3(%arg0: i32) -> (i32, i32) {
    %c0_i32 = arith.constant 0 : i32
    %c0_i32_0 = arith.constant 0 : i32
    return %arg0, %c0_i32 : i32, i32
  }
}

</mosaic_0001>

<llo_original>
// kernel: tpu_custom_call.1
$region0: #{tpu_custom_call.1}
  #allocation0 [shape = 'u32[]', space=smem, size = 0x4, offset = 0x4, fixed_abs, tag = 'smem constant byte address 0x4 - core index']
  #allocation1 [shape = 'u32[72,128]{1,0:T(1,128)}', space=vmem, size = 0x9000, scoped, tag = 'internal scratch']
  %s0 = inlined_call_operand.hbm [shape: f32[16,32], index: 0, kind: input, shape index: {}]
  %s1 = inlined_call_operand.hbm [shape: f32[14,352], index: 1, kind: input, shape index: {}]
  %s2 = inlined_call_operand.hbm [shape: bf16[288,128], index: 2, kind: input, shape index: {}]
  %s3 = inlined_call_operand.hbm [shape: f32[16,128], index: 3, kind: output, shape index: {}]
  %s4 = sld [smem:[#allocation0]]
  $region34: #{tpu_custom_call.1} parent=0
    _
  %s6 = ssub.s32 1, %s4
  %s7 = scalar_select 0, %s6, %s4
  $region1: #{tpu_custom_call.1} parent=0
    #allocation2 [shape = 'u8[8192]{0}', space=vmem, size = 0x2000, scoped, tag = 'input window, operand 0, single buffered']
    #allocation3 [shape = 's32[1]{0}', space=sflag, size = 0x4, scoped, tag = 'scoped memory for tpu_custom_call.1']
    #allocation4 [shape = 's32[1]{0}', space=sflag, size = 0x4, scoped, tag = 'scoped memory for tpu_custom_call.1']
    #allocation5 [shape = 'u8[24576]{0}', space=vmem, size = 0x6000, scoped, tag = 'input window, operand 1, single buffered']
    #allocation6 [shape = 's32[1]{0}', space=sflag, size = 0x4, scoped, tag = 'scoped memory for tpu_custom_call.1']
    #allocation7 [shape = 'u8[73728]{0}', space=vmem, size = 0x12000, scoped, tag = 'input window, operand 2, single buffered']
    #allocation8 [shape = 'u8[8192]{0}', space=vmem, size = 0x2000, scoped, tag = 'output window, operand 0, single buffered']
    %8 = vsyncpa [#allocation3], 0
    %9 = vsyncpa [#allocation6], 0
    %10 = vsyncpa [#allocation4], 0
    // Predicated region
    $region2: #{tpu_custom_call.1} parent=1 // pred_check
      _
    $region3: #{tpu_custom_call.1} parent=1 // pred_check_branch
      %12 = sbr.rel (0) target = $region5
    $region4: #{tpu_custom_call.1} parent=1 // pred_region
      %14 = vsyncadd [#allocation3], 0
      %s15 = sshll.u32 %s0, 4
      %s16 = int_to_ptr.hbm [resolvable:$true] %s15
      %s17 = sshll.u32 [#allocation2], 4
      %s18 = int_to_ptr.vmem [resolvable:$true] %s17
      %23 = dma.hbm_to_vmem [thread:$0]  %s16, 256, %s18, [#allocation3], 128, 128, 8
    $region5: #{tpu_custom_call.1} parent=1 // pred_fallthru
      _
    // Predicated region
    $region6: #{tpu_custom_call.1} parent=1 // pred_check
      _
    $region7: #{tpu_custom_call.1} parent=1 // pred_check_branch
      %25 = sbr.rel (0) target = $region9
    $region8: #{tpu_custom_call.1} parent=1 // pred_region
      %27 = vsyncadd [#allocation6], 0
      %s28 = sshll.u32 %s1, 4
      %s29 = int_to_ptr.hbm [resolvable:$true] %s28
      %s30 = sshll.u32 [#allocation5], 4
      %s31 = int_to_ptr.vmem [resolvable:$true] %s30
      %36 = dma.hbm_to_vmem [thread:$0]  %s29, 768, %s31, [#allocation6], 384, 384, 24
    $region9: #{tpu_custom_call.1} parent=1 // pred_fallthru
      _
    // Predicated region
    $region10: #{tpu_custom_call.1} parent=1 // pred_check
      _
    $region11: #{tpu_custom_call.1} parent=1 // pred_check_branch
      %38 = sbr.rel (0) target = $region13
    $region12: #{tpu_custom_call.1} parent=1 // pred_region
      %40 = vsyncadd [#allocation6], 0
      %s41 = sshll.u32 %s2, 4
      %s42 = int_to_ptr.hbm [resolvable:$true] %s41
      %s43 = sshll.u32 [#allocation7], 4
      %s44 = int_to_ptr.vmem [resolvable:$true] %s43
      %49 = dma.hbm_to_vmem [thread:$0]  %s42, 2304, %s44, [#allocation6], 64, 64, 4
    $region13: #{tpu_custom_call.1} parent=1 // pred_fallthru
      _
    // Predicated region
    $region14: #{tpu_custom_call.1} parent=1 // pred_check
      _
    $region15: #{tpu_custom_call.1} parent=1 // pred_check_branch
      %51 = sbr.rel (0) target = $region17
    $region16: #{tpu_custom_call.1} parent=1 // pred_region
      %53 = dma.done [#allocation3], 256
    $region17: #{tpu_custom_call.1} parent=1 // pred_fallthru
      _
    // Predicated region
    $region18: #{tpu_custom_call.1} parent=1 // pred_check
      _
    $region19: #{tpu_custom_call.1} parent=1 // pred_check_branch
      %55 = sbr.rel (0) target = $region21
    $region20: #{tpu_custom_call.1} parent=1 // pred_region
      %57 = dma.done [#allocation6], 768
    $region21: #{tpu_custom_call.1} parent=1 // pred_fallthru
      _
    // Predicated region
    $region22: #{tpu_custom_call.1} parent=1 // pred_check
      _
    $region23: #{tpu_custom_call.1} parent=1 // pred_check_branch
      %59 = sbr.rel (0) target = $region25
    $region24: #{tpu_custom_call.1} parent=1 // pred_region
      %61 = dma.done [#allocation6], 2304
    $region25: #{tpu_custom_call.1} parent=1 // pred_fallthru
      _
    %v63 = vld [vmem:[#allocation2] sm:$0xff]
    %v64 = vld [vmem:[#allocation2 + $0x8] sm:$0xff]
    %67 = vrot.lane.b32.xlu0 %v63, 32
    %v68 = vpop.permute.xlu0 %67
    %69 = vrot.lane.b32.xlu0 %v64, 32
    %v70 = vpop.permute.xlu0 %69
    %73 = vrot.lane.b32.xlu0 %v63, 64
    %v74 = vpop.permute.xlu0 %73
    %75 = vrot.lane.b32.xlu0 %v64, 64
    %v76 = vpop.permute.xlu0 %75
    %79 = vrot.lane.b32.xlu0 %v63, 96
    %v80 = vpop.permute.xlu0 %79
    %81 = vrot.lane.b32.xlu0 %v64, 96
    %v82 = vpop.permute.xlu0 %81
    %vm85 = vcmask 261120
    %v86 = vsel %vm85, %v63, %v68
    %v87 = vsel %vm85, %v64, %v70
    %vm88 = vcmask 523264
    %v89 = vsel %vm88, %v86, %v74
    %v90 = vsel %vm88, %v87, %v76
    %vm91 = vcmask 785408
    %v92 = vsel %vm91, %v89, %v80
    %v93 = vsel %vm91, %v90, %v82
    %v94 = vld [vmem:[#allocation5] ss:$8 sm:$0x7]
    %s95 = scalar_lea.vmem [#allocation5], 1
    %v96 = vld [vmem:[%s95] ss:$8 sm:$0x7]
    %v98 = vperm.slane %v94, 0
    %v99 = vperm.slane %v94, 1
    %v100 = vperm.slane %v94, 2
    %vm104 = vcmp.ge.f32.partialorder %v92, %v98
    %vm105 = vcmp.ge.f32.partialorder %v92, %v99
    %vm106 = vcmp.ge.f32.partialorder %v89, %v100
    %vm107 = vcmp.ge.f32.partialorder %v93, %v98
    %vm108 = vcmp.ge.f32.partialorder %v93, %v99
    %vm109 = vcmp.ge.f32.partialorder %v90, %v100
    %v111 = vperm.slane %v96, 0
    %v112 = vperm.slane %v96, 1
    %v113 = vperm.slane %v96, 2
    %vm117 = vcmp.lt.f32.partialorder %v92, %v111
    %vm118 = vcmp.lt.f32.partialorder %v92, %v112
    %vm119 = vcmp.lt.f32.partialorder %v89, %v113
    %vm120 = vcmp.lt.f32.partialorder %v93, %v111
    %vm121 = vcmp.lt.f32.partialorder %v93, %v112
    %vm122 = vcmp.lt.f32.partialorder %v90, %v113
    %vm123 = vmand %vm104, %vm117
    %vm124 = vmand %vm105, %vm118
    %vm125 = vmand %vm106, %vm119
    %vm126 = vmand %vm107, %vm120
    %vm127 = vmand %vm108, %vm121
    %vm128 = vmand %vm109, %vm122
    %v129 = vsel %vm123, 1.0, 0.0
    %v130 = vsel %vm124, 1.0, 0.0
    %v131 = vsel %vm125, 1.0, 0.0
    %v132 = vsel %vm126, 1.0, 0.0
    %v133 = vsel %vm127, 1.0, 0.0
    %v134 = vsel %vm128, 1.0, 0.0
    %s135 = scalar_lea.vmem [#allocation5], 2
    %v136 = vld [vmem:[%s135] ss:$8 sm:$0x7]
    %s137 = scalar_lea.vmem [#allocation5], 3
    %v138 = vld [vmem:[%s137] ss:$8 sm:$0x7]
    %s139 = scalar_lea.vmem [#allocation5], 4
    %v140 = vld [vmem:[%s139] ss:$8 sm:$0x7]
    %s141 = scalar_lea.vmem [#allocation5], 5
    %v142 = vld [vmem:[%s141] ss:$8 sm:$0x7]
    %v144 = vperm.slane %v136, 0
    %v145 = vperm.slane %v136, 1
    %v146 = vperm.slane %v136, 2
    %v150 = vmul.f32 %v92, %v144
    %v151 = vmul.f32 %v92, %v145
    %v152 = vmul.f32 %v89, %v146
    %v153 = vmul.f32 %v93, %v144
    %v154 = vmul.f32 %v93, %v145
    %v155 = vmul.f32 %v90, %v146
    %v157 = vperm.slane %v138, 0
    %v158 = vperm.slane %v138, 1
    %v159 = vperm.slane %v138, 2
    %v163 = vsub.f32 %v150, %v157
    %v164 = vsub.f32 %v151, %v158
    %v165 = vsub.f32 %v152, %v159
    %v166 = vsub.f32 %v153, %v157
    %v167 = vsub.f32 %v154, %v158
    %v168 = vsub.f32 %v155, %v159
    %v169 = vmul.f32 %v163, %v129
    %v170 = vmul.f32 %v164, %v130
    %v171 = vmul.f32 %v165, %v131
    %v172 = vmul.f32 %v166, %v132
    %v173 = vmul.f32 %v167, %v133
    %v174 = vmul.f32 %v168, %v134
    %v176 = vperm.slane %v140, 0
    %v177 = vperm.slane %v140, 1
    %v178 = vperm.slane %v140, 2
    %v182 = vmul.f32 %v92, %v176
    %v183 = vmul.f32 %v92, %v177
    %v184 = vmul.f32 %v89, %v178
    %v185 = vmul.f32 %v93, %v176
    %v186 = vmul.f32 %v93, %v177
    %v187 = vmul.f32 %v90, %v178
    %v189 = vperm.slane %v142, 0
    %v190 = vperm.slane %v142, 1
    %v191 = vperm.slane %v142, 2
    %v195 = vsub.f32 %v189, %v182
    %v196 = vsub.f32 %v190, %v183
    %v197 = vsub.f32 %v191, %v184
    %v198 = vsub.f32 %v189, %v185
    %v199 = vsub.f32 %v190, %v186
    %v200 = vsub.f32 %v191, %v187
    %207 = vrot.lane.b32.xlu0 %v129, 96
    %v208 = vpop.permute.xlu0 %207
    %209 = vrot.lane.b32.xlu0 %v130, 96
    %v210 = vpop.permute.xlu0 %209
    %211 = vrot.lane.b32.xlu0 %v131, 96
    %v212 = vpop.permute.xlu0 %211
    %213 = vrot.lane.b32.xlu0 %v132, 96
    %v214 = vpop.permute.xlu0 %213
    %215 = vrot.lane.b32.xlu0 %v133, 96
    %v216 = vpop.permute.xlu0 %215
    %217 = vrot.lane.b32.xlu0 %v134, 96
    %v218 = vpop.permute.xlu0 %217
    %v219 = vsel %vm91, %v208, %v210
    %v220 = vsel %vm91, %v210, %v212
    %v221 = vsel %vm91, %v214, %v216
    %v222 = vsel %vm91, %v216, %v218
    %v229 = vmul.f32 %v195, %v219
    %v230 = vmul.f32 %v196, %v220
    %v231 = vmul.f32 %v197, %v212
    %v232 = vmul.f32 %v198, %v221
    %v233 = vmul.f32 %v199, %v222
    %v234 = vmul.f32 %v200, %v218
    %v235 = vadd.f32 %v169, %v229
    %v236 = vadd.f32 %v170, %v230
    %v237 = vadd.f32 %v171, %v231
    %v238 = vadd.f32 %v172, %v232
    %v239 = vadd.f32 %v173, %v233
    %v240 = vadd.f32 %v174, %v234
    %s241 = scalar_lea.vmem [#allocation5], 6
    %v242 = vld [vmem:[%s241] ss:$8 sm:$0x7]
    %s243 = scalar_lea.vmem [#allocation5], 7
    %v244 = vld [vmem:[%s243] ss:$8 sm:$0x7]
    %s245 = scalar_lea.vmem [#allocation5], 24
    %v246 = vld [vmem:[%s245] ss:$8 sm:$0x7]
    %s247 = scalar_lea.vmem [#allocation5], 25
    %v248 = vld [vmem:[%s247] ss:$8 sm:$0x7]
    %v250 = vperm.slane %v242, 0
    %v251 = vperm.slane %v242, 1
    %v252 = vperm.slane %v242, 2
    %v256 = vmul.f32 %v92, %v250
    %v257 = vmul.f32 %v92, %v251
    %v258 = vmul.f32 %v89, %v252
    %v259 = vmul.f32 %v93, %v250
    %v260 = vmul.f32 %v93, %v251
    %v261 = vmul.f32 %v90, %v252
    %v263 = vperm.slane %v244, 0
    %v264 = vperm.slane %v244, 1
    %v265 = vperm.slane %v244, 2
    %v269 = vsub.f32 %v256, %v263
    %v270 = vsub.f32 %v257, %v264
    %v271 = vsub.f32 %v258, %v265
    %v272 = vsub.f32 %v259, %v263
    %v273 = vsub.f32 %v260, %v264
    %v274 = vsub.f32 %v261, %v265
    %v275 = vmul.f32 %v269, %v235
    %v276 = vmul.f32 %v270, %v236
    %v277 = vmul.f32 %v271, %v237
    %v278 = vmul.f32 %v272, %v238
    %v279 = vmul.f32 %v273, %v239
    %v280 = vmul.f32 %v274, %v240
    %v282 = vperm.slane %v246, 0
    %v283 = vperm.slane %v246, 1
    %v284 = vperm.slane %v246, 2
    %v288 = vmul.f32 %v92, %v282
    %v289 = vmul.f32 %v92, %v283
    %v290 = vmul.f32 %v89, %v284
    %v291 = vmul.f32 %v93, %v282
    %v292 = vmul.f32 %v93, %v283
    %v293 = vmul.f32 %v90, %v284
    %v295 = vperm.slane %v248, 0
    %v296 = vperm.slane %v248, 1
    %v297 = vperm.slane %v248, 2
    %v301 = vsub.f32 %v295, %v288
    %v302 = vsub.f32 %v296, %v289
    %v303 = vsub.f32 %v297, %v290
    %v304 = vsub.f32 %v295, %v291
    %v305 = vsub.f32 %v296, %v292
    %v306 = vsub.f32 %v297, %v293
    %313 = vrot.lane.b32.xlu0 %v235, 96
    %v314 = vpop.permute.xlu0 %313
    %315 = vrot.lane.b32.xlu0 %v236, 96
    %v316 = vpop.permute.xlu0 %315
    %317 = vrot.lane.b32.xlu0 %v237, 96
    %v318 = vpop.permute.xlu0 %317
    %319 = vrot.lane.b32.xlu0 %v238, 96
    %v320 = vpop.permute.xlu0 %319
    %321 = vrot.lane.b32.xlu0 %v239, 96
    %v322 = vpop.permute.xlu0 %321
    %323 = vrot.lane.b32.xlu0 %v240, 96
    %v324 = vpop.permute.xlu0 %323
    %v325 = vsel %vm91, %v314, %v316
    %v326 = vsel %vm91, %v316, %v318
    %v327 = vsel %vm91, %v320, %v322
    %v328 = vsel %vm91, %v322, %v324
    %v335 = vmul.f32 %v301, %v325
    %v336 = vmul.f32 %v302, %v326
    %v337 = vmul.f32 %v303, %v318
    %v338 = vmul.f32 %v304, %v327
    %v339 = vmul.f32 %v305, %v328
    %v340 = vmul.f32 %v306, %v324
    %v341 = vadd.f32 %v275, %v335
    %v342 = vadd.f32 %v276, %v336
    %v343 = vadd.f32 %v277, %v337
    %v344 = vadd.f32 %v278, %v338
    %v345 = vadd.f32 %v279, %v339
    %v346 = vadd.f32 %v280, %v340
    %s347 = scalar_lea.vmem [#allocation5], 26
    %v348 = vld [vmem:[%s347] ss:$8 sm:$0x3]
    %s349 = scalar_lea.vmem [#allocation5], 27
    %v350 = vld [vmem:[%s349] ss:$8 sm:$0x3]
    %s351 = scalar_lea.vmem [#allocation5], 28
    %v352 = vld [vmem:[%s351] ss:$8 sm:$0x3]
    %s353 = scalar_lea.vmem [#allocation5], 29
    %v354 = vld [vmem:[%s353] ss:$8 sm:$0x3]
    %v356 = vperm.slane %v348, 0
    %v357 = vperm.slane %v348, 1
    %v360 = vmul.f32 %v92, %v356
    %v361 = vmul.f32 %v92, %v357
    %v362 = vmul.f32 %v93, %v356
    %v363 = vmul.f32 %v93, %v357
    %v365 = vperm.slane %v350, 0
    %v366 = vperm.slane %v350, 1
    %v369 = vsub.f32 %v360, %v365
    %v370 = vsub.f32 %v361, %v366
    %v371 = vsub.f32 %v362, %v365
    %v372 = vsub.f32 %v363, %v366
    %v373 = vmul.f32 %v369, %v341
    %v374 = vmul.f32 %v370, %v342
    %v375 = vmul.f32 %v371, %v344
    %v376 = vmul.f32 %v372, %v345
    %v378 = vperm.slane %v352, 0
    %v379 = vperm.slane %v352, 1
    %v382 = vmul.f32 %v92, %v378
    %v383 = vmul.f32 %v92, %v379
    %v384 = vmul.f32 %v93, %v378
    %v385 = vmul.f32 %v93, %v379
    %v387 = vperm.slane %v354, 0
    %v388 = vperm.slane %v354, 1
    %v391 = vsub.f32 %v387, %v382
    %v392 = vsub.f32 %v388, %v383
    %v393 = vsub.f32 %v387, %v384
    %v394 = vsub.f32 %v388, %v385
    %401 = vrot.lane.b32.xlu0 %v341, 96
    %v402 = vpop.permute.xlu0 %401
    %403 = vrot.lane.b32.xlu0 %v342, 96
    %v404 = vpop.permute.xlu0 %403
    %405 = vrot.lane.b32.xlu0 %v343, 96
    %v406 = vpop.permute.xlu0 %405
    %407 = vrot.lane.b32.xlu0 %v344, 96
    %v408 = vpop.permute.xlu0 %407
    %409 = vrot.lane.b32.xlu0 %v345, 96
    %v410 = vpop.permute.xlu0 %409
    %411 = vrot.lane.b32.xlu0 %v346, 96
    %v412 = vpop.permute.xlu0 %411
    %v413 = vsel %vm91, %v402, %v404
    %v414 = vsel %vm91, %v404, %v406
    %v415 = vsel %vm91, %v408, %v410
    %v416 = vsel %vm91, %v410, %v412
    %v421 = vmul.f32 %v391, %v413
    %v422 = vmul.f32 %v392, %v414
    %v423 = vmul.f32 %v393, %v415
    %v424 = vmul.f32 %v394, %v416
    %v425 = vadd.f32 %v373, %v421
    %v426 = vadd.f32 %v374, %v422
    %v427 = vadd.f32 %v375, %v423
    %v428 = vadd.f32 %v376, %v424
    %v429 = vxor.u32 %v63, 2147483648
    %v430 = vxor.u32 %v64, 2147483648
    %v431 = vmul.f32 %v429, 1.442695
    %v432 = vpow.pop %v431
    %v433 = vmul.f32 %v430, 1.442695
    %v434 = vpow.pop %v433
    %v435 = vadd.f32 %v432, 1.0
    %v436 = vadd.f32 %v434, 1.0
    %v437 = vrcp.pop %v435
    %v438 = vmul.f32 %v435, %v437
    %v439 = vsub.f32 1.0, %v438
    %v440 = vmul.f32 %v437, %v439
    %v441 = vadd.f32 %v437, %v440
    %vm442 = vweird.f32 %v435
    %vm443 = vweird.f32 %v437
    %vm444 = vmor %vm442, %vm443
    %v445 = vsel %vm444, %v437, %v441
    %v446 = vand.u32 2147483647, %v435
    %vm447 = vcmp.eq.f32.partialorder %v446, 8.507059e+37
    %v448 = vand.u32 %v435, 2147483648
    %v449 = vor.u32 1.1754944e-38, %v448
    %v450 = vsel %vm447, %v449, %v445
    %v451 = vmul.f32 1.0, %v450
    %v452 = vrcp.pop %v436
    %v453 = vmul.f32 %v436, %v452
    %v454 = vsub.f32 1.0, %v453
    %v455 = vmul.f32 %v452, %v454
    %v456 = vadd.f32 %v452, %v455
    %vm457 = vweird.f32 %v436
    %vm458 = vweird.f32 %v452
    %vm459 = vmor %vm457, %vm458
    %v460 = vsel %vm459, %v452, %v456
    %v461 = vand.u32 2147483647, %v436
    %vm462 = vcmp.eq.f32.partialorder %v461, 8.507059e+37
    %v463 = vand.u32 %v436, 2147483648
    %v464 = vor.u32 1.1754944e-38, %v463
    %v465 = vsel %vm462, %v464, %v460
    %v466 = vmul.f32 1.0, %v465
    %v467 = vmul.f32 %v63, %v451
    %v468 = vmul.f32 %v64, %v466
    %473 = vrot.lane.b32.xlu0 %v425, 32
    %v474 = vpop.permute.xlu0 %473
    %475 = vrot.lane.b32.xlu0 %v426, 32
    %v476 = vpop.permute.xlu0 %475
    %477 = vrot.lane.b32.xlu0 %v427, 32
    %v478 = vpop.permute.xlu0 %477
    %479 = vrot.lane.b32.xlu0 %v428, 32
    %v480 = vpop.permute.xlu0 %479
    %v481 = vsel %vm85, %v474, %v476
    %v482 = vsel %vm85, %v478, %v480
    %v489 = vsel %vm85, %v467, %v474
    %v490 = vsel %vm85, %v468, %v478
    %v491 = vpack.c.bf16 %v490, %v489
    %v492 = vpack.c.bf16 %v482, %v481
    %v493 = vpack.c.bf16 %v480, %v476
    %v494 = vld [vmem:[#allocation7] sm:$0xf]
    %v495 = vld [vmem:[#allocation7 + $0x4] sm:$0xf]
    %v496 = vld [vmem:[#allocation7 + $0x8] sm:$0xf]
    %v497 = vld [vmem:[#allocation7 + $0xc] sm:$0xf]
    %v498 = vld [vmem:[#allocation7 + $0x10] sm:$0xf]
    %v499 = vld [vmem:[#allocation7 + $0x14] sm:$0xf]
    %v500 = vld [vmem:[#allocation7 + $0x18] sm:$0xf]
    %v501 = vld [vmem:[#allocation7 + $0x1c] sm:$0xf]
    %v502 = vld [vmem:[#allocation7 + $0x20] sm:$0xf]
    %v503 = vld [vmem:[#allocation7 + $0x24] sm:$0xf]
    %v504 = vld [vmem:[#allocation7 + $0x28] sm:$0xf]
    %v505 = vld [vmem:[#allocation7 + $0x2c] sm:$0xf]
    %v506 = vld [vmem:[#allocation7 + $0x30] sm:$0xf]
    %v507 = vld [vmem:[#allocation7 + $0x34] sm:$0xf]
    %v508 = vld [vmem:[#allocation7 + $0x38] sm:$0xf]
    %v509 = vld [vmem:[#allocation7 + $0x3c] sm:$0xf]
    %v510 = vld [vmem:[#allocation7 + $0x40] sm:$0xf]
    %v511 = vld [vmem:[#allocation7 + $0x44] sm:$0xf]
    %v512 = vld [vmem:[#allocation7 + $0x48] sm:$0xf]
    %v513 = vld [vmem:[#allocation7 + $0x4c] sm:$0xf]
    %v514 = vld [vmem:[#allocation7 + $0x50] sm:$0xf]
    %v515 = vld [vmem:[#allocation7 + $0x54] sm:$0xf]
    %v516 = vld [vmem:[#allocation7 + $0x58] sm:$0xf]
    %v517 = vld [vmem:[#allocation7 + $0x5c] sm:$0xf]
    %v518 = vld [vmem:[#allocation7 + $0x60] sm:$0xf]
    %v519 = vld [vmem:[#allocation7 + $0x64] sm:$0xf]
    %v520 = vld [vmem:[#allocation7 + $0x68] sm:$0xf]
    %v521 = vld [vmem:[#allocation7 + $0x6c] sm:$0xf]
    %v522 = vld [vmem:[#allocation7 + $0x70] sm:$0xf]
    %v523 = vld [vmem:[#allocation7 + $0x74] sm:$0xf]
    %v524 = vld [vmem:[#allocation7 + $0x78] sm:$0xf]
    %v525 = vld [vmem:[#allocation7 + $0x7c] sm:$0xf]
    %v526 = vld [vmem:[#allocation7 + $0x80] sm:$0xf]
    %v527 = vld [vmem:[#allocation7 + $0x84] sm:$0xf]
    %v528 = vld [vmem:[#allocation7 + $0x88] sm:$0xf]
    %v529 = vld [vmem:[#allocation7 + $0x8c] sm:$0xf]
    %v566 = vunpack.c.l.b16 %v494
    %v567 = vunpack.c.l.b16 %v495
    %v568 = vunpack.c.l.b16 %v496
    %v569 = vunpack.c.l.b16 %v497
    %v570 = vunpack.c.l.b16 %v498
    %v571 = vunpack.c.l.b16 %v499
    %v572 = vunpack.c.l.b16 %v500
    %v573 = vunpack.c.l.b16 %v501
    %v574 = vunpack.c.l.b16 %v502
    %v575 = vunpack.c.l.b16 %v503
    %v576 = vunpack.c.l.b16 %v504
    %v577 = vunpack.c.l.b16 %v505
    %v578 = vunpack.c.l.b16 %v506
    %v579 = vunpack.c.l.b16 %v507
    %v580 = vunpack.c.l.b16 %v508
    %v581 = vunpack.c.l.b16 %v509
    %v582 = vunpack.c.l.b16 %v510
    %v583 = vunpack.c.l.b16 %v511
    %v584 = vunpack.c.l.b16 %v512
    %v585 = vunpack.c.l.b16 %v513
    %v586 = vunpack.c.l.b16 %v514
    %v587 = vunpack.c.l.b16 %v515
    %v588 = vunpack.c.l.b16 %v516
    %v589 = vunpack.c.l.b16 %v517
    %v590 = vunpack.c.l.b16 %v518
    %v591 = vunpack.c.l.b16 %v519
    %v592 = vunpack.c.l.b16 %v520
    %v593 = vunpack.c.l.b16 %v521
    %v594 = vunpack.c.l.b16 %v522
    %v595 = vunpack.c.l.b16 %v523
    %v596 = vunpack.c.l.b16 %v524
    %v597 = vunpack.c.l.b16 %v525
    %v598 = vunpack.c.l.b16 %v526
    %v599 = vunpack.c.l.b16 %v527
    %v600 = vunpack.c.l.b16 %v528
    %v601 = vunpack.c.l.b16 %v529
    %v602 = vpack.c.b16 %v567, %v566
    %v603 = vpack.c.b16 %v569, %v568
    %v604 = vpack.c.b16 %v571, %v570
    %v605 = vpack.c.b16 %v573, %v572
    %v606 = vpack.c.b16 %v575, %v574
    %v607 = vpack.c.b16 %v577, %v576
    %v608 = vpack.c.b16 %v579, %v578
    %v609 = vpack.c.b16 %v581, %v580
    %v610 = vpack.c.b16 %v583, %v582
    %v611 = vpack.c.b16 %v585, %v584
    %v612 = vpack.c.b16 %v587, %v586
    %v613 = vpack.c.b16 %v589, %v588
    %v614 = vpack.c.b16 %v591, %v590
    %v615 = vpack.c.b16 %v593, %v592
    %v616 = vpack.c.b16 %v595, %v594
    %v617 = vpack.c.b16 %v597, %v596
    %v618 = vpack.c.b16 %v599, %v598
    %v619 = vpack.c.b16 %v601, %v600
    %v639 = vsel %vm85, %v493, 0
    %641 = vmatpush.bf16.msra.mxu0 %v609
    %642 = vmatpush.bf16.msra.mxu0 %v608
    %643 = vmatpush.bf16.msra.mxu0 %v607
    %644 = vmatpush.bf16.msra.mxu0 %v606
    %645 = vmatpush.bf16.msra.mxu0 %v605
    %646 = vmatpush.bf16.msra.mxu0 %v604
    %647 = vmatpush.bf16.msra.mxu0 %v603
    %648 = vmatpush.bf16.msra.mxu0 %v602
    %649 = vmatmul.bf16.gmra.mxu0 %v491
    %v650 = vpop.f32.mrf.mxu0
    %v651 = vadd.f32 0.0, %v650
    %v652 = vpop.f32.mrf.mxu0
    %v653 = vadd.f32 0.0, %v652
    %654 = vdwg.mxu0
    %655 = vmatpush.bf16.msra.mxu0 %v617
    %656 = vmatpush.bf16.msra.mxu0 %v616
    %657 = vmatpush.bf16.msra.mxu0 %v615
    %658 = vmatpush.bf16.msra.mxu0 %v614
    %659 = vmatpush.bf16.msra.mxu0 %v613
    %660 = vmatpush.bf16.msra.mxu0 %v612
    %661 = vmatpush.bf16.msra.mxu0 %v611
    %662 = vmatpush.bf16.msra.mxu0 %v610
    %663 = vmatmul.bf16.gmra.mxu0 %v492
    %v664 = vpop.f32.mrf.mxu0
    %v665 = vadd.f32 %v651, %v664
    %v666 = vpop.f32.mrf.mxu0
    %v667 = vadd.f32 %v653, %v666
    %668 = vdwg.mxu0
    %669 = vmatpush.bf16.msra.mxu0 0
    %670 = vmatpush.bf16.msra.mxu0 0
    %671 = vmatpush.bf16.msra.mxu0 0
    %672 = vmatpush.bf16.msra.mxu0 0
    %673 = vmatpush.bf16.msra.mxu0 0
    %674 = vmatpush.bf16.msra.mxu0 0
    %675 = vmatpush.bf16.msra.mxu0 %v619
    %676 = vmatpush.bf16.msra.mxu0 %v618
    %677 = vmatmul.bf16.gmra.mxu0 %v639
    %v678 = vpop.f32.mrf.mxu0
    %v679 = vadd.f32 %v665, %v678
    %v680 = vpop.f32.mrf.mxu0
    %v681 = vadd.f32 %v667, %v680
    %682 = vdwg.mxu0
    %683 = vst [vmem:[#allocation8] sm:$0xff] %v679
    %684 = vst [vmem:[#allocation8 + $0x8] sm:$0xff] %v681
    // Predicated region
    $region26: #{tpu_custom_call.1} parent=1 // pred_check
      _
    $region27: #{tpu_custom_call.1} parent=1 // pred_check_branch
      %686 = sbr.rel (0) target = $region29
    $region28: #{tpu_custom_call.1} parent=1 // pred_region
      %688 = vsyncadd [#allocation4], 0
      %s689 = sshll.u32 [#allocation8], 4
      %s690 = int_to_ptr.vmem [resolvable:$true] %s689
      %s691 = sshll.u32 %s3, 4
      %s692 = int_to_ptr.hbm [resolvable:$true] %s691
      %697 = dma.vmem_to_hbm [thread:$0]  %s690, 256, %s692, [#allocation4], 128, 128, 8
    $region29: #{tpu_custom_call.1} parent=1 // pred_fallthru
      _
    // Predicated region
    $region30: #{tpu_custom_call.1} parent=1 // pred_check
      _
    $region31: #{tpu_custom_call.1} parent=1 // pred_check_branch
      %699 = sbr.rel (0) target = $region33
    $region32: #{tpu_custom_call.1} parent=1 // pred_region
      %701 = dma.done [#allocation4], 256
    $region33: #{tpu_custom_call.1} parent=1 // pred_fallthru
      _
    %702 = vsyncpa [#allocation3], 1
    %703 = vsyncpa [#allocation6], 1
    %704 = vsyncpa [#allocation4], 1

</llo_original>
